<compile_context>
chip_gen: v5e
topology: v5e:2x2
jax: 0.10.0
libtpu: 0.0.40
codegen_flags: <defaults>
</compile_context>

<pallas_src>
import functools

import jax
import jax.numpy as jnp
from jax import lax
from jax.experimental import pallas as pl
from jax.experimental.pallas import tpu as pltpu

EPS = 1e-5  # PyTorch BatchNorm2d default eps

# Matmul operand dtype inside the kernels. float32 keeps the correctness check
# tight; on v5e set to jnp.bfloat16 for peak MXU throughput (accumulation stays
# f32 via preferred_element_type).
COMPUTE_DTYPE = jnp.float32

DEFAULT_BLOCK_ROWS = 256  # row tile of the (B*H*W, C) matmuls


# --------------------------------------------------------------------------
# Pallas kernels
# --------------------------------------------------------------------------
def _mm_affine_kernel(x_ref, w_ref, s_ref, t_ref, o_ref, *, relu_cols):
    """o = (x @ w) * s + t, ReLU applied to the first `relu_cols` columns."""
    y = jnp.dot(x_ref[...].astype(COMPUTE_DTYPE),
                w_ref[...].astype(COMPUTE_DTYPE),
                preferred_element_type=jnp.float32)
    y = y * s_ref[...] + t_ref[...]
    out_cols = o_ref.shape[-1]
    if relu_cols >= out_cols:
        y = jnp.maximum(y, 0.0)
    elif relu_cols > 0:
        col = lax.broadcasted_iota(jnp.int32, y.shape, 1)
        y = jnp.where(col < relu_cols, jnp.maximum(y, 0.0), y)
    o_ref[...] = y.astype(o_ref.dtype)


def matmul_affine(x2d, wT, scale, shift, *, relu_cols,
                  block_rows=DEFAULT_BLOCK_ROWS):
    """Row-tiled (N, K) @ (K, C_out) with fused channelwise affine (+ReLU)."""
    N, K = x2d.shape
    C_out = wT.shape[1]
    bn = min(block_rows, N)
    kern = functools.partial(_mm_affine_kernel, relu_cols=relu_cols)
    return pl.pallas_call(
        kern,
        out_shape=jax.ShapeDtypeStruct((N, C_out), jnp.float32),
        grid=(pl.cdiv(N, bn),),
        in_specs=[
            pl.BlockSpec((bn, K), lambda i: (i, 0)),
            pl.BlockSpec((K, C_out), lambda i: (0, 0)),
            pl.BlockSpec((1, C_out), lambda i: (0, 0)),
            pl.BlockSpec((1, C_out), lambda i: (0, 0)),
        ],
        out_specs=pl.BlockSpec((bn, C_out), lambda i: (i, 0)),
        compiler_params=pltpu.CompilerParams(
            dimension_semantics=("parallel",)),
    )(x2d, wT, scale.reshape(1, C_out), shift.reshape(1, C_out))


def _fourier_mm_kernel(re_ref, im_ref, wr_ref, wi_ref, s_ref, t_ref, o_ref):
    """FourierUnit 1x1 conv + BN + ReLU on de-interleaved (re, im) planes."""
    yr = jnp.dot(re_ref[...].astype(COMPUTE_DTYPE),
                 wr_ref[...].astype(COMPUTE_DTYPE),
                 preferred_element_type=jnp.float32)
    yi = jnp.dot(im_ref[...].astype(COMPUTE_DTYPE),
                 wi_ref[...].astype(COMPUTE_DTYPE),
                 preferred_element_type=jnp.float32)
    y = (yr + yi) * s_ref[...] + t_ref[...]
    o_ref[...] = jnp.maximum(y, 0.0)


def fourier_conv_bn_relu(re2d, im2d, w_re, w_im, scale, shift, *,
                         block_rows=DEFAULT_BLOCK_ROWS):
    N, c = re2d.shape
    C_out = w_re.shape[1]
    bn = min(block_rows, N)
    return pl.pallas_call(
        _fourier_mm_kernel,
        out_shape=jax.ShapeDtypeStruct((N, C_out), jnp.float32),
        grid=(pl.cdiv(N, bn),),
        in_specs=[
            pl.BlockSpec((bn, c), lambda i: (i, 0)),
            pl.BlockSpec((bn, c), lambda i: (i, 0)),
            pl.BlockSpec((c, C_out), lambda i: (0, 0)),
            pl.BlockSpec((c, C_out), lambda i: (0, 0)),
            pl.BlockSpec((1, C_out), lambda i: (0, 0)),
            pl.BlockSpec((1, C_out), lambda i: (0, 0)),
        ],
        out_specs=pl.BlockSpec((bn, C_out), lambda i: (i, 0)),
        compiler_params=pltpu.CompilerParams(
            dimension_semantics=("parallel",)),
    )(re2d, im2d, w_re, w_im, scale.reshape(1, C_out), shift.reshape(1, C_out))


def _spectral_out_kernel(h_ref, fu_ref, lg_ref, w_ref, s_ref, t_ref, o_ref):
    """out = relu(((h + fu) @ w2 + lg) * s + t)  — conv2 + add + BN_g + ReLU."""
    s_in = (h_ref[...] + fu_ref[...]).astype(COMPUTE_DTYPE)
    gg = jnp.dot(s_in, w_ref[...].astype(COMPUTE_DTYPE),
                 preferred_element_type=jnp.float32)
    y = (gg + lg_ref[...]) * s_ref[...] + t_ref[...]
    o_ref[...] = jnp.maximum(y, 0.0)


def spectral_out(h2d, fu2d, lg2d, w2T, scale, shift, *,
                 block_rows=DEFAULT_BLOCK_ROWS):
    N, hid = h2d.shape
    C_out = w2T.shape[1]
    bn = min(block_rows, N)
    return pl.pallas_call(
        _spectral_out_kernel,
        out_shape=jax.ShapeDtypeStruct((N, C_out), jnp.float32),
        grid=(pl.cdiv(N, bn),),
        in_specs=[
            pl.BlockSpec((bn, hid), lambda i: (i, 0)),
            pl.BlockSpec((bn, hid), lambda i: (i, 0)),
            pl.BlockSpec((bn, C_out), lambda i: (i, 0)),
            pl.BlockSpec((hid, C_out), lambda i: (0, 0)),
            pl.BlockSpec((1, C_out), lambda i: (0, 0)),
            pl.BlockSpec((1, C_out), lambda i: (0, 0)),
        ],
        out_specs=pl.BlockSpec((bn, C_out), lambda i: (i, 0)),
        compiler_params=pltpu.CompilerParams(
            dimension_semantics=("parallel",)),
    )(h2d, fu2d, lg2d, w2T, scale.reshape(1, C_out), shift.reshape(1, C_out))


# --------------------------------------------------------------------------
# FFC forward (Pallas implementation)
# --------------------------------------------------------------------------
def ffc_forward(x, p):
    B, C, H, W = x.shape
    C_l, C_g = p["C_l"], p["C_g"]
    hidden = p["st_w1"].shape[0]

    # Single NCHW -> NHWC transpose at entry; channels land on the lane axis.
    x_nhwc = jnp.transpose(x, (0, 2, 3, 1))

    # ---- fused 3x3 convs: conv_ll + conv_gl -> local rows, conv_lg -> global
    # rows (conv_lg weights zero-padded over the global input channels). ----
    w_local_rows = jnp.concatenate([p["w_ll"], p["w_gl"]], axis=1)        # (C_l, C, 3, 3)
    w_lg_rows = jnp.concatenate(
        [p["w_lg"], jnp.zeros((C_g, C_g, 3, 3), jnp.float32)], axis=1)    # (C_g, C, 3, 3)
    w_comb = jnp.concatenate([w_local_rows, w_lg_rows], axis=0)           # (C_out, C, 3, 3)
    C_out3 = C_l + C_g
    # im2col K index = (kh*3 + kw)*C + ci  ->  weight matrix (9*C, C_out)
    wT3 = jnp.transpose(w_comb, (2, 3, 1, 0)).reshape(9 * C, C_out3)

    # BN(local) + biases folded into the matmul epilogue; the conv_lg rows keep
    # identity scale and carry only the conv bias (consumed later, raw).
    s_l = p["bn_l_gamma"] / jnp.sqrt(p["bn_l_rv"] + EPS)
    scale3 = jnp.concatenate([s_l, jnp.ones((C_g,), jnp.float32)])
    shift3 = jnp.concatenate(
        [p["bn_l_beta"] - p["bn_l_rm"] * s_l + (p["b_ll"] + p["b_gl"]) * s_l,
         p["b_lg"]])

    # TODO(synk): im2col patches are built by XLA (9 shifted slices + concat);
    # for very large feature maps an in-kernel halo DMA would avoid the 9x blow-up.
    xpad = jnp.pad(x_nhwc, ((0, 0), (1, 1), (1, 1), (0, 0)))
    cols = [xpad[:, kh:kh + H, kw:kw + W, :]
            for kh in range(3) for kw in range(3)]
    patches = jnp.concatenate(cols, axis=-1).reshape(B * H * W, 9 * C)

    conv3 = matmul_affine(patches, wT3, scale3, shift3, relu_cols=C_l)    # (BHW, C_out3)
    out_local = conv3[:, :C_l]      # already BN_l + ReLU applied
    lg_part = conv3[:, C_l:]        # conv_lg(x_l) + b_lg (raw)

    # ---- SpectralTransform (conv_gg), channels-last throughout ----
    x_g2d = x_nhwc[..., C_l:].reshape(B * H * W, C_g)
    s1 = p["st_bn1_gamma"] / jnp.sqrt(p["st_bn1_rv"] + EPS)
    t1 = p["st_bn1_beta"] - p["st_bn1_rm"] * s1
    h2d = matmul_affine(x_g2d, p["st_w1"].T, s1, t1, relu_cols=hidden)    # (BHW, hidden)

    # FourierUnit. TODO(synk): rfft2/irfft2 have no Pallas primitive; kept in XLA.
    h = h2d.reshape(B, H, W, hidden)
    ff = jnp.fft.rfft2(h, axes=(1, 2), norm="ortho")                      # (B, H, Wf, hidden)
    Wf = ff.shape[2]
    re2d = ff.real.reshape(B * H * Wf, hidden)
    im2d = ff.imag.reshape(B * H * Wf, hidden)

    # De-interleave the [re, im]-interleaved 1x1 conv at trace time so no
    # channel shuffles touch the activations: output = [re block | im block].
    fw = p["fu_w"]                                                        # (2h, 2h) OI
    w_re = jnp.concatenate([fw[0::2, 0::2].T, fw[1::2, 0::2].T], axis=1)  # (h, 2h)
    w_im = jnp.concatenate([fw[0::2, 1::2].T, fw[1::2, 1::2].T], axis=1)  # (h, 2h)
    s_fu = p["fu_bn_gamma"] / jnp.sqrt(p["fu_bn_rv"] + EPS)
    t_fu = p["fu_bn_beta"] - p["fu_bn_rm"] * s_fu
    s_fu_d = jnp.concatenate([s_fu[0::2], s_fu[1::2]])
    t_fu_d = jnp.concatenate([t_fu[0::2], t_fu[1::2]])
    y2d = fourier_conv_bn_relu(re2d, im2d, w_re, w_im, s_fu_d, t_fu_d)    # (BHWf, 2h)
    y = y2d.reshape(B, H, Wf, 2 * hidden)
    cplx = y[..., :hidden] + 1j * y[..., hidden:]
    fu = jnp.fft.irfft2(cplx, s=(H, W), axes=(1, 2), norm="ortho")        # (B, H, W, hidden)

    # conv2 of SpectralTransform fused with "+ conv_lg" add and BN_g + ReLU.
    s_g = p["bn_g_gamma"] / jnp.sqrt(p["bn_g_rv"] + EPS)
    t_g = p["bn_g_beta"] - p["bn_g_rm"] * s_g
    out_global = spectral_out(h2d, fu.reshape(B * H * W, hidden), lg_part,
                              p["st_w2"].T, s_g, t_g)                     # (BHW, C_g)

    out_nhwc = jnp.concatenate([out_local, out_global],
                               axis=-1).reshape(B, H, W, C)
    return jnp.transpose(out_nhwc, (0, 3, 1, 2))


# --------------------------------------------------------------------------
# Pure-JAX reference (for correctness check)
# --------------------------------------------------------------------------
def reference_forward(x, p):
    def conv3(xx, w, b):
        y = lax.conv_general_dilated(xx, w, (1, 1), "SAME",
                                     dimension_numbers=("NCHW", "OIHW", "NCHW"),
                                     precision=lax.Precision.HIGHEST)
        return y + b[None, :, None, None]

    def conv1(xx, w):  # w: (out, in)
        return jnp.einsum("bchw,oc->bohw", xx, w, precision=lax.Precision.HIGHEST)

    def bn(xx, g, bt, rm, rv):
        s = g / jnp.sqrt(rv + EPS)
        return xx * s[None, :, None, None] + (bt - rm * s)[None, :, None, None]

    C_l, C_g = p["C_l"], p["C_g"]
    x_l, x_g = x[:, :C_l], x[:, C_l:]

    out_local = conv3(x_l, p["w_ll"], p["b_ll"]) + conv3(x_g, p["w_gl"], p["b_gl"])

    # SpectralTransform reference
    h = jax.nn.relu(bn(conv1(x_g, p["st_w1"]), p["st_bn1_gamma"],
                       p["st_bn1_beta"], p["st_bn1_rm"], p["st_bn1_rv"]))
    B, c, H, W = h.shape
    ff = jnp.fft.rfft2(h, norm="ortho")
    Wf = ff.shape[-1]
    st = jnp.stack([ff.real, ff.imag], axis=2).reshape(B, 2 * c, H, Wf)
    y = jax.nn.relu(bn(conv1(st, p["fu_w"]), p["fu_bn_gamma"],
                       p["fu_bn_beta"], p["fu_bn_rm"], p["fu_bn_rv"]))
    y = y.reshape(B, c, 2, H, Wf)
    fu = jnp.fft.irfft2(y[:, :, 0] + 1j * y[:, :, 1], s=(H, W), norm="ortho")
    gg = conv1(h + fu, p["st_w2"])

    out_global = gg + conv3(x_l, p["w_lg"], p["b_lg"])
    out_local = jax.nn.relu(bn(out_local, p["bn_l_gamma"], p["bn_l_beta"],
                               p["bn_l_rm"], p["bn_l_rv"]))
    out_global = jax.nn.relu(bn(out_global, p["bn_g_gamma"], p["bn_g_beta"],
                                p["bn_g_rm"], p["bn_g_rv"]))
    return jnp.concatenate([out_local, out_global], axis=1)


# --------------------------------------------------------------------------
if __name__ == "__main__":
    B, C, H, W = 2, 8, 16, 16
    global_percent = 0.5
    C_g = round(C * global_percent)
    C_l = C - C_g
    hidden = C_g // 2

    kx, kp = jax.random.split(jax.random.PRNGKey(0))
    x = jax.random.normal(kx, (B, C, H, W), jnp.float32)

    keys = jax.random.split(kp, 24)

    def nrm(k, shape, s=0.1):
        return s * jax.random.normal(k, shape, jnp.float32)

    params = {
        "C_l": C_l, "C_g": C_g,
        # 3x3 convs (OIHW)
        "w_ll": nrm(keys[0], (C_l, C_l, 3, 3)), "b_ll": nrm(keys[1], (C_l,)),
        "w_lg": nrm(keys[2], (C_g, C_l, 3, 3)), "b_lg": nrm(keys[3], (C_g,)),
        "w_gl": nrm(keys[4], (C_l, C_g, 3, 3)), "b_gl": nrm(keys[5], (C_l,)),
        # SpectralTransform (conv_gg)
        "st_w1": nrm(keys[6], (hidden, C_g)),
        "st_bn1_gamma": 1.0 + nrm(keys[7], (hidden,)),
        "st_bn1_beta": nrm(keys[8], (hidden,)),
        "st_bn1_rm": nrm(keys[9], (hidden,)),
        "st_bn1_rv": 1.0 + 0.1 * jax.random.uniform(keys[10], (hidden,)),
        "fu_w": nrm(keys[11], (2 * hidden, 2 * hidden)),
        "fu_bn_gamma": 1.0 + nrm(keys[12], (2 * hidden,)),
        "fu_bn_beta": nrm(keys[13], (2 * hidden,)),
        "fu_bn_rm": nrm(keys[14], (2 * hidden,)),
        "fu_bn_rv": 1.0 + 0.1 * jax.random.uniform(keys[15], (2 * hidden,)),
        "st_w2": nrm(keys[16], (C_g, hidden)),
        # norm_act (local) and norm_act_global
        "bn_l_gamma": 1.0 + nrm(keys[17], (C_l,)),
        "bn_l_beta": nrm(keys[18], (C_l,)),
        "bn_l_rm": nrm(keys[19], (C_l,)),
        "bn_l_rv": 1.0 + 0.1 * jax.random.uniform(keys[20], (C_l,)),
        "bn_g_gamma": 1.0 + nrm(keys[21], (C_g,)),
        "bn_g_beta": nrm(keys[22], (C_g,)),
        "bn_g_rm": nrm(keys[23], (C_g,)),
        "bn_g_rv": jnp.ones((C_g,), jnp.float32),
    }

    out = jax.block_until_ready(ffc_forward(x, params))
    ref = jax.block_until_ready(reference_forward(x, params))

    assert out.shape == (B, C, H, W), out.shape
    max_err = float(jnp.max(jnp.abs(out - ref)))
    # MXU matmuls at default f32 precision may round operands through
    # bf16-class passes; the reference uses Precision.HIGHEST, hence the bound.
    assert max_err < 2e-2, f"max abs err {max_err}"
    print("KERNEL_OK")
</pallas_src>

<mosaic_0001>
module attributes {stable_mosaic.version = 11 : i64} {
  func.func @_mm_affine_kernel(%arg0: i32, %arg1: memref<256x72xf32, #tpu.memory_space<vmem>>, %arg2: memref<72x8xf32, #tpu.memory_space<vmem>>, %arg3: memref<1x8xf32, #tpu.memory_space<vmem>>, %arg4: memref<1x8xf32, #tpu.memory_space<vmem>>, %arg5: memref<256x8xf32, #tpu.memory_space<vmem>>) attributes {dimension_semantics = [#tpu.dimension_semantics<parallel>], iteration_bounds = array<i64: 2>, scalar_prefetch = 0 : i64, scratch_operands = 0 : i64, tpu.core_type = #tpu.core_type<tc>, window_params = [{transform_indices = @transform_0, window_bounds = array<i64: 256, 72>}, {pipeline_mode = #tpu.pipeline_mode<synchronous>, transform_indices = @transform_1, window_bounds = array<i64: 72, 8>}, {pipeline_mode = #tpu.pipeline_mode<synchronous>, transform_indices = @transform_2, window_bounds = array<i64: 1, 8>}, {pipeline_mode = #tpu.pipeline_mode<synchronous>, transform_indices = @transform_3, window_bounds = array<i64: 1, 8>}, {transform_indices = @transform_4, window_bounds = array<i64: 256, 8>}]} {
    %c0 = arith.constant 0 : index
    %c0_0 = arith.constant 0 : index
    %0 = vector.load %arg1[%c0, %c0_0] : memref<256x72xf32, #tpu.memory_space<vmem>>, vector<256x72xf32>
    %c0_1 = arith.constant 0 : index
    %c0_2 = arith.constant 0 : index
    %1 = vector.load %arg2[%c0_1, %c0_2] : memref<72x8xf32, #tpu.memory_space<vmem>>, vector<72x8xf32>
    %cst = arith.constant dense<0.000000e+00> : vector<256x8xf32>
    %2 = tpu.matmul %0, %1, %cst {dimension_numbers = #tpu.dot_dimension_numbers<[1], [0], [0], [1], [0, 0, 1, 1], [], []>} : vector<256x72xf32>, vector<72x8xf32>, vector<256x8xf32> -> vector<256x8xf32>
    %c0_3 = arith.constant 0 : index
    %c0_4 = arith.constant 0 : index
    %3 = vector.load %arg3[%c0_3, %c0_4] : memref<1x8xf32, #tpu.memory_space<vmem>>, vector<1x8xf32>
    %4 = vector.broadcast %3 : vector<1x8xf32> to vector<256x8xf32>
    %5 = arith.mulf %2, %4 : vector<256x8xf32>
    %c0_5 = arith.constant 0 : index
    %c0_6 = arith.constant 0 : index
    %6 = vector.load %arg4[%c0_5, %c0_6] : memref<1x8xf32, #tpu.memory_space<vmem>>, vector<1x8xf32>
    %7 = vector.broadcast %6 : vector<1x8xf32> to vector<256x8xf32>
    %8 = arith.addf %5, %7 : vector<256x8xf32>
    %9 = tpu.iota {dimensions = array<i32: 1>} : vector<256x8xi32>
    %c4_i32 = arith.constant 4 : i32
    %10 = vector.broadcast %c4_i32 : i32 to vector<256x8xi32>
    %11 = arith.cmpi slt, %9, %10 : vector<256x8xi32>
    %cst_7 = arith.constant 0.000000e+00 : f32
    %12 = vector.broadcast %cst_7 : f32 to vector<256x8xf32>
    %13 = arith.maximumf %8, %12 : vector<256x8xf32>
    %14 = arith.select %11, %13, %8 : vector<256x8xi1>, vector<256x8xf32>
    %c0_8 = arith.constant 0 : index
    %c0_9 = arith.constant 0 : index
    %15 = vector.load %arg5[%c0_8, %c0_9] : memref<256x8xf32, #tpu.memory_space<vmem>>, vector<256x8xf32>
    tpu.vector_store %arg5[%c0_8, %c0_9], %14 {strides = array<i32>} : memref<256x8xf32, #tpu.memory_space<vmem>>, vector<256x8xf32>,
    return
  }
  func.func @transform_0(%arg0: i32) -> (i32, i32) {
    %c0_i32 = arith.constant 0 : i32
    %c0_i32_0 = arith.constant 0 : i32
    return %arg0, %c0_i32 : i32, i32
  }
  func.func @transform_1(%arg0: i32) -> (i32, i32) {
    %c0_i32 = arith.constant 0 : i32
    %c0_i32_0 = arith.constant 0 : i32
    %c0_i32_1 = arith.constant 0 : i32
    return %c0_i32, %c0_i32_0 : i32, i32
  }
  func.func @transform_2(%arg0: i32) -> (i32, i32) {
    %c0_i32 = arith.constant 0 : i32
    %c0_i32_0 = arith.constant 0 : i32
    %c0_i32_1 = arith.constant 0 : i32
    return %c0_i32, %c0_i32_0 : i32, i32
  }
  func.func @transform_3(%arg0: i32) -> (i32, i32) {
    %c0_i32 = arith.constant 0 : i32
    %c0_i32_0 = arith.constant 0 : i32
    %c0_i32_1 = arith.constant 0 : i32
    return %c0_i32, %c0_i32_0 : i32, i32
  }
  func.func @transform_4(%arg0: i32) -> (i32, i32) {
    %c0_i32 = arith.constant 0 : i32
    %c0_i32_0 = arith.constant 0 : i32
    return %arg0, %c0_i32 : i32, i32
  }
}

</mosaic_0001>

<llo_original>
// kernel: tpu_custom_call.1
$region0: #{tpu_custom_call.1}
  #allocation0 [shape = 'u32[]', space=smem, size = 0x4, offset = 0x4, fixed_abs, tag = 'smem constant byte address 0x4 - core index']
  #allocation1 [shape = 'u32[72,128]{1,0:T(1,128)}', space=vmem, size = 0x9000, scoped, tag = 'internal scratch']
  %s0 = inlined_call_operand.vmem [shape: f32[512,72], index: 0, kind: input, shape index: {}]
  %s1 = inlined_call_operand.vmem [shape: f32[72,8], index: 1, kind: input, shape index: {}]
  %s2 = inlined_call_operand.vmem [shape: f32[1,8], index: 2, kind: input, shape index: {}]
  %s3 = inlined_call_operand.vmem [shape: f32[1,8], index: 3, kind: input, shape index: {}]
  %s4 = inlined_call_operand.vmem [shape: f32[512,8], index: 4, kind: output, shape index: {}]
  %s5 = sld [smem:[#allocation0]]
  $region49: #{tpu_custom_call.1} parent=0
    _
  %s7 = ssub.s32 1, %s5
  %s8 = scalar_select 0, %s7, %s5
  loop: start=0, step=1, limit=4
  $region2: #{tpu_custom_call.1} parent=0 // loop_pre_header
    _
  $region3: #{tpu_custom_call.1} parent=0 // loop_header
    %s10 = sphi 0, %s14
    %p11 = scmp.ge.s32.totalorder %s10, 4
    %s20 = sphi 0, %s22
    %s23 = sphi 0, %s20
    %s24 = sphi 0, %s23
    %s40 = sphi 0, %s24
    %s44 = sphi 0, %s44
    %s46 = sphi 0, %s44
    %s47 = sphi 0, %s46
    %s61 = sphi 0, %s47
    %s65 = sphi 0, %s65
    %s67 = sphi 0, %s65
    %s68 = sphi 0, %s67
    %s82 = sphi 0, %s68
    %s86 = sphi 0, %s86
    %s88 = sphi 0, %s86
    %s89 = sphi 0, %s88
    %s103 = sphi 0, %s89
    %s109 = sphi 0, %s111
    %s112 = sphi 0, %s109
    %s113 = sphi 0, %s112
    %s129 = sphi 0, %s113
  $region4: #{tpu_custom_call.1} parent=0 // loop_header_branch
    %13 = sbr.rel (%p11) target = $region8
  $region5: #{tpu_custom_call.1} parent=0 // loop_body
    %s15 = ssub.s32 %s10, 1
    %s16 = ssub.s32 %s10, 2
    %s17 = sadd.s32 %s10, 1
    %s18 = ssub.s32 %s10, %s17
    %p19 = scmp.eq.s32.totalorder %s18, 0
    %s21 = sadd.s32 %s20, 1
    %s22 = scalar_select %p19, %s20, %s21
    %p25 = pneg %p19
    %p26 = scmp.eq.s32.totalorder %s10, 1
    %p27 = por %p25, %p26
    %p28 = scmp.ne.s32.totalorder %s20, %s23
    %p29 = scmp.eq.s32.totalorder %s10, 0
    %p30 = por %p28, %p29
    %p31 = scmp.ne.s32.totalorder %s20, %s23
    %p32 = scmp.eq.s32.totalorder %s15, 1
    %p33 = por %p31, %p32
    %p34 = scmp.ne.s32.totalorder %s23, %s24
    %p35 = scmp.eq.s32.totalorder %s15, 0
    %p36 = por %p34, %p35
    %p37 = scmp.ne.s32.totalorder %s23, %s24
    %p38 = scmp.eq.s32.totalorder %s16, 1
    %p39 = por %p37, %p38
    %p41 = scmp.ne.s32.totalorder %s24, %s40
    %p42 = scmp.eq.s32.totalorder %s16, 0
    %p43 = por %p41, %p42
    %s45 = sadd.s32 %s44, 1
    %p48 = scmp.eq.s32.totalorder %s10, 1
    %p49 = scmp.ne.s32.totalorder %s44, %s46
    %p50 = scmp.eq.s32.totalorder %s10, 0
    %p51 = por %p49, %p50
    %p52 = scmp.ne.s32.totalorder %s44, %s46
    %p53 = scmp.eq.s32.totalorder %s15, 1
    %p54 = por %p52, %p53
    %p55 = scmp.ne.s32.totalorder %s46, %s47
    %p56 = scmp.eq.s32.totalorder %s15, 0
    %p57 = por %p55, %p56
    %p58 = scmp.ne.s32.totalorder %s46, %s47
    %p59 = scmp.eq.s32.totalorder %s16, 1
    %p60 = por %p58, %p59
    %p62 = scmp.ne.s32.totalorder %s47, %s61
    %p63 = scmp.eq.s32.totalorder %s16, 0
    %p64 = por %p62, %p63
    %s66 = sadd.s32 %s65, 1
    %p69 = scmp.eq.s32.totalorder %s10, 1
    %p70 = scmp.ne.s32.totalorder %s65, %s67
    %p71 = scmp.eq.s32.totalorder %s10, 0
    %p72 = por %p70, %p71
    %p73 = scmp.ne.s32.totalorder %s65, %s67
    %p74 = scmp.eq.s32.totalorder %s15, 1
    %p75 = por %p73, %p74
    %p76 = scmp.ne.s32.totalorder %s67, %s68
    %p77 = scmp.eq.s32.totalorder %s15, 0
    %p78 = por %p76, %p77
    %p79 = scmp.ne.s32.totalorder %s67, %s68
    %p80 = scmp.eq.s32.totalorder %s16, 1
    %p81 = por %p79, %p80
    %p83 = scmp.ne.s32.totalorder %s68, %s82
    %p84 = scmp.eq.s32.totalorder %s16, 0
    %p85 = por %p83, %p84
    %s87 = sadd.s32 %s86, 1
    %p90 = scmp.eq.s32.totalorder %s10, 1
    %p91 = scmp.ne.s32.totalorder %s86, %s88
    %p92 = scmp.eq.s32.totalorder %s10, 0
    %p93 = por %p91, %p92
    %p94 = scmp.ne.s32.totalorder %s86, %s88
    %p95 = scmp.eq.s32.totalorder %s15, 1
    %p96 = por %p94, %p95
    %p97 = scmp.ne.s32.totalorder %s88, %s89
    %p98 = scmp.eq.s32.totalorder %s15, 0
    %p99 = por %p97, %p98
    %p100 = scmp.ne.s32.totalorder %s88, %s89
    %p101 = scmp.eq.s32.totalorder %s16, 1
    %p102 = por %p100, %p101
    %p104 = scmp.ne.s32.totalorder %s89, %s103
    %p105 = scmp.eq.s32.totalorder %s16, 0
    %p106 = por %p104, %p105
    %s107 = ssub.s32 %s10, %s17
    %p108 = scmp.eq.s32.totalorder %s107, 0
    %s110 = sadd.s32 %s109, 1
    %s111 = scalar_select %p108, %s109, %s110
    %p114 = pneg %p108
    %p115 = scmp.eq.s32.totalorder %s10, 1
    %p116 = por %p114, %p115
    %p117 = scmp.ne.s32.totalorder %s109, %s112
    %p118 = scmp.eq.s32.totalorder %s10, 0
    %p119 = por %p117, %p118
    %p120 = scmp.ne.s32.totalorder %s109, %s112
    %p121 = scmp.eq.s32.totalorder %s15, 1
    %p122 = por %p120, %p121
    %p123 = scmp.ne.s32.totalorder %s112, %s113
    %p124 = scmp.eq.s32.totalorder %s15, 0
    %p125 = por %p123, %p124
    %p126 = scmp.ne.s32.totalorder %s112, %s113
    %p127 = scmp.eq.s32.totalorder %s16, 1
    %p128 = por %p126, %p127
    %p130 = scmp.ne.s32.totalorder %s113, %s129
    %p131 = scmp.eq.s32.totalorder %s16, 0
    %p132 = por %p130, %p131
    %p133 = scmp.le.s32.totalorder 1, %s10
    %p134 = scmp.lt.s32.totalorder %s10, 3
    %p135 = pnand %p133, %p134
    %p136 = pneg %p135
    // Predicated region
    $region9: #{tpu_custom_call.1} parent=5 // pred_check
      _
    $region10: #{tpu_custom_call.1} parent=5 // pred_check_branch
      %138 = sbr.rel (%p135) target = $region12
    $region11: #{tpu_custom_call.1} parent=5 // pred_region
      %s139 = ssub.s32 %s10, 1
      // Predicated region
      $region13: #{tpu_custom_call.1} parent=11 // pred_check
        %p140 = pneg %p57
      $region14: #{tpu_custom_call.1} parent=11 // pred_check_branch
        %142 = sbr.rel (%p140) target = $region16
      $region15: #{tpu_custom_call.1} parent=11 // pred_region
        _
      $region16: #{tpu_custom_call.1} parent=11 // pred_fallthru
        _
      // Predicated region
      $region17: #{tpu_custom_call.1} parent=11 // pred_check
        %p143 = pneg %p78
      $region18: #{tpu_custom_call.1} parent=11 // pred_check_branch
        %145 = sbr.rel (%p143) target = $region20
      $region19: #{tpu_custom_call.1} parent=11 // pred_region
        _
      $region20: #{tpu_custom_call.1} parent=11 // pred_fallthru
        _
      // Predicated region
      $region21: #{tpu_custom_call.1} parent=11 // pred_check
        %p146 = pneg %p99
      $region22: #{tpu_custom_call.1} parent=11 // pred_check_branch
        %148 = sbr.rel (%p146) target = $region24
      $region23: #{tpu_custom_call.1} parent=11 // pred_region
        _
      $region24: #{tpu_custom_call.1} parent=11 // pred_fallthru
        _
    $region12: #{tpu_custom_call.1} parent=5 // pred_fallthru
      _
    %p149 = scmp.lt.s32.totalorder %s10, 2
    // Predicated region
    $region25: #{tpu_custom_call.1} parent=5 // pred_check
      %p150 = pneg %p149
    $region26: #{tpu_custom_call.1} parent=5 // pred_check_branch
      %152 = sbr.rel (%p150) target = $region28
    $region27: #{tpu_custom_call.1} parent=5 // pred_region
      // Predicated region
      $region29: #{tpu_custom_call.1} parent=27 // pred_check
        %p153 = pneg %p30
      $region30: #{tpu_custom_call.1} parent=27 // pred_check_branch
        %155 = sbr.rel (%p153) target = $region32
      $region31: #{tpu_custom_call.1} parent=27 // pred_region
        %s156 = smul.u32 32, %s10
        %p157 = scmp.lt.s32.totalorder %s156, 63
        %s158 = scalar_select %p157, %s156, 63
        %s159 = smul.addr %s158, 8
        %s160 = scalar_lea.vmem %s0, %s159
        %s161 = smul.u32 32, %s10
      $region32: #{tpu_custom_call.1} parent=27 // pred_fallthru
        _
    $region28: #{tpu_custom_call.1} parent=5 // pred_fallthru
      _
    %p162 = scmp.le.s32.totalorder 1, %s10
    %p163 = scmp.lt.s32.totalorder %s10, 3
    %p164 = pnand %p162, %p163
    %p165 = pneg %p164
    // Predicated region
    $region33: #{tpu_custom_call.1} parent=5 // pred_check
      _
    $region34: #{tpu_custom_call.1} parent=5 // pred_check_branch
      %167 = sbr.rel (%p164) target = $region36
    $region35: #{tpu_custom_call.1} parent=5 // pred_region
      %s168 = ssub.s32 %s10, 1
      %s169 = smul.u32 32, %s15
      %p170 = scmp.lt.s32.totalorder %s169, 63
      %s171 = scalar_select %p170, %s169, 63
      %s172 = smul.addr %s171, 8
      %s173 = scalar_lea.vmem %s0, %s172
      %p174 = pneg %p36
      %p175 = pneg %p33
      %p176 = pneg %p57
      %p177 = pneg %p54
      %p178 = pneg %p78
      %p179 = pneg %p75
      %p180 = pneg %p99
      %p181 = pneg %p96
      %p182 = pneg %p125
      %p183 = pneg %p122
      %s184 = smul.u32 32, %s15
      %p185 = scmp.lt.s32.totalorder %s184, 63
      %s186 = scalar_select %p185, %s184, 63
      %s187 = smul.addr %s186, 8
      %s188 = scalar_lea.vmem %s4, %s187
      %s189 = smul.u32 32, %s15
      %p190 = scmp.lt.s32.totalorder %s189, 63
      %s191 = scalar_select %p190, %s189, 63
      %s192 = smul.addr %s191, 8
      %s193 = scalar_lea.vmem %s0, %s192
      %s194 = smul.u32 32, %s15
      %s195 = smul.u32 32, %s15
      %p196 = scmp.lt.s32.totalorder %s195, 63
      %s197 = scalar_select %p196, %s195, 63
      %s198 = smul.addr %s197, 8
      %s199 = scalar_lea.vmem %s4, %s198
      %s200 = smul.u32 32, %s15
      %v201 = vld [vmem:[%s193] sm:$0xff]
      %v202 = vld [vmem:[%s193 + $0x8] sm:$0xff]
      %v203 = vld [vmem:[%s193 + $0x10] sm:$0xff]
      %v204 = vld [vmem:[%s193 + $0x18] sm:$0xff]
      %v205 = vld [vmem:[%s193 + $0x20] sm:$0xff]
      %v206 = vld [vmem:[%s193 + $0x28] sm:$0xff]
      %v207 = vld [vmem:[%s193 + $0x30] sm:$0xff]
      %v208 = vld [vmem:[%s193 + $0x38] sm:$0xff]
      %v209 = vld [vmem:[%s193 + $0x40] sm:$0xff]
      %v210 = vld [vmem:[%s193 + $0x48] sm:$0xff]
      %v211 = vld [vmem:[%s193 + $0x50] sm:$0xff]
      %v212 = vld [vmem:[%s193 + $0x58] sm:$0xff]
      %v213 = vld [vmem:[%s193 + $0x60] sm:$0xff]
      %v214 = vld [vmem:[%s193 + $0x68] sm:$0xff]
      %v215 = vld [vmem:[%s193 + $0x70] sm:$0xff]
      %v216 = vld [vmem:[%s193 + $0x78] sm:$0xff]
      %v217 = vld [vmem:[%s193 + $0x80] sm:$0xff]
      %v218 = vld [vmem:[%s193 + $0x88] sm:$0xff]
      %v219 = vld [vmem:[%s193 + $0x90] sm:$0xff]
      %v220 = vld [vmem:[%s193 + $0x98] sm:$0xff]
      %v221 = vld [vmem:[%s193 + $0xa0] sm:$0xff]
      %v222 = vld [vmem:[%s193 + $0xa8] sm:$0xff]
      %v223 = vld [vmem:[%s193 + $0xb0] sm:$0xff]
      %v224 = vld [vmem:[%s193 + $0xb8] sm:$0xff]
      %v225 = vld [vmem:[%s193 + $0xc0] sm:$0xff]
      %v226 = vld [vmem:[%s193 + $0xc8] sm:$0xff]
      %v227 = vld [vmem:[%s193 + $0xd0] sm:$0xff]
      %v228 = vld [vmem:[%s193 + $0xd8] sm:$0xff]
      %v229 = vld [vmem:[%s193 + $0xe0] sm:$0xff]
      %v230 = vld [vmem:[%s193 + $0xe8] sm:$0xff]
      %v231 = vld [vmem:[%s193 + $0xf0] sm:$0xff]
      %v232 = vld [vmem:[%s193 + $0xf8] sm:$0xff]
      %v233 = vld [vmem:[%s1] sm:$0xff]
      %v234 = vld [vmem:[%s1 + $0x8] sm:$0xff]
      %v235 = vld [vmem:[%s1 + $0x10] sm:$0xff]
      %v236 = vld [vmem:[%s1 + $0x18] sm:$0xff]
      %v237 = vld [vmem:[%s1 + $0x20] sm:$0xff]
      %v238 = vld [vmem:[%s1 + $0x28] sm:$0xff]
      %v239 = vld [vmem:[%s1 + $0x30] sm:$0xff]
      %v240 = vld [vmem:[%s1 + $0x38] sm:$0xff]
      %v241 = vld [vmem:[%s1 + $0x40] sm:$0xff]
      %vm242 = vcmask 588800
      %v244 = vsel %vm242, %v201, 0
      %v247 = vsel %vm242, %v202, 0
      %v250 = vsel %vm242, %v203, 0
      %v253 = vsel %vm242, %v204, 0
      %v256 = vsel %vm242, %v205, 0
      %v259 = vsel %vm242, %v206, 0
      %v262 = vsel %vm242, %v207, 0
      %v265 = vsel %vm242, %v208, 0
      %v268 = vsel %vm242, %v209, 0
      %v271 = vsel %vm242, %v210, 0
      %v274 = vsel %vm242, %v211, 0
      %v277 = vsel %vm242, %v212, 0
      %v280 = vsel %vm242, %v213, 0
      %v283 = vsel %vm242, %v214, 0
      %v286 = vsel %vm242, %v215, 0
      %v289 = vsel %vm242, %v216, 0
      %v292 = vsel %vm242, %v217, 0
      %v295 = vsel %vm242, %v218, 0
      %v298 = vsel %vm242, %v219, 0
      %v301 = vsel %vm242, %v220, 0
      %v304 = vsel %vm242, %v221, 0
      %v307 = vsel %vm242, %v222, 0
      %v310 = vsel %vm242, %v223, 0
      %v313 = vsel %vm242, %v224, 0
      %v316 = vsel %vm242, %v225, 0
      %v319 = vsel %vm242, %v226, 0
      %v322 = vsel %vm242, %v227, 0
      %v325 = vsel %vm242, %v228, 0
      %v328 = vsel %vm242, %v229, 0
      %v331 = vsel %vm242, %v230, 0
      %v334 = vsel %vm242, %v231, 0
      %v337 = vsel %vm242, %v232, 0
      %339 = vmatpush.msra.mxu0 0.0
      %340 = vmatpush.msra.mxu0 0.0
      %341 = vmatpush.msra.mxu0 0.0
      %342 = vmatpush.msra.mxu0 0.0
      %343 = vmatpush.msra.mxu0 0.0
      %344 = vmatpush.msra.mxu0 0.0
      %345 = vmatpush.msra.mxu0 0.0
      %346 = vmatpush.msra.mxu0 %v241
      %347 = vmatpush.msra.mxu0 %v240
      %348 = vmatpush.msra.mxu0 %v239
      %349 = vmatpush.msra.mxu0 %v238
      %350 = vmatpush.msra.mxu0 %v237
      %351 = vmatpush.msra.mxu0 %v236
      %352 = vmatpush.msra.mxu0 %v235
      %353 = vmatpush.msra.mxu0 %v234
      %354 = vmatpush.msra.mxu0 %v233
      %355 = vmatmul.f32.gmra.mxu0 %v244
      %v356 = vpop.f32.mrf.mxu0
      %v357 = vadd.f32 0.0, %v356
      %358 = vmatmul.f32.gmra.mxu0 %v247
      %v359 = vpop.f32.mrf.mxu0
      %v360 = vadd.f32 0.0, %v359
      %361 = vmatmul.f32.gmra.mxu0 %v250
      %v362 = vpop.f32.mrf.mxu0
      %v363 = vadd.f32 0.0, %v362
      %364 = vmatmul.f32.gmra.mxu0 %v253
      %v365 = vpop.f32.mrf.mxu0
      %v366 = vadd.f32 0.0, %v365
      %367 = vmatmul.f32.gmra.mxu0 %v256
      %v368 = vpop.f32.mrf.mxu0
      %v369 = vadd.f32 0.0, %v368
      %370 = vmatmul.f32.gmra.mxu0 %v259
      %v371 = vpop.f32.mrf.mxu0
      %v372 = vadd.f32 0.0, %v371
      %373 = vmatmul.f32.gmra.mxu0 %v262
      %v374 = vpop.f32.mrf.mxu0
      %v375 = vadd.f32 0.0, %v374
      %376 = vmatmul.f32.gmra.mxu0 %v265
      %v377 = vpop.f32.mrf.mxu0
      %v378 = vadd.f32 0.0, %v377
      %379 = vmatmul.f32.gmra.mxu0 %v268
      %v380 = vpop.f32.mrf.mxu0
      %v381 = vadd.f32 0.0, %v380
      %382 = vmatmul.f32.gmra.mxu0 %v271
      %v383 = vpop.f32.mrf.mxu0
      %v384 = vadd.f32 0.0, %v383
      %385 = vmatmul.f32.gmra.mxu0 %v274
      %v386 = vpop.f32.mrf.mxu0
      %v387 = vadd.f32 0.0, %v386
      %388 = vmatmul.f32.gmra.mxu0 %v277
      %v389 = vpop.f32.mrf.mxu0
      %v390 = vadd.f32 0.0, %v389
      %391 = vmatmul.f32.gmra.mxu0 %v280
      %v392 = vpop.f32.mrf.mxu0
      %v393 = vadd.f32 0.0, %v392
      %394 = vmatmul.f32.gmra.mxu0 %v283
      %v395 = vpop.f32.mrf.mxu0
      %v396 = vadd.f32 0.0, %v395
      %397 = vmatmul.f32.gmra.mxu0 %v286
      %v398 = vpop.f32.mrf.mxu0
      %v399 = vadd.f32 0.0, %v398
      %400 = vmatmul.f32.gmra.mxu0 %v289
      %v401 = vpop.f32.mrf.mxu0
      %v402 = vadd.f32 0.0, %v401
      %403 = vmatmul.f32.gmra.mxu0 %v292
      %v404 = vpop.f32.mrf.mxu0
      %v405 = vadd.f32 0.0, %v404
      %406 = vmatmul.f32.gmra.mxu0 %v295
      %v407 = vpop.f32.mrf.mxu0
      %v408 = vadd.f32 0.0, %v407
      %409 = vmatmul.f32.gmra.mxu0 %v298
      %v410 = vpop.f32.mrf.mxu0
      %v411 = vadd.f32 0.0, %v410
      %412 = vmatmul.f32.gmra.mxu0 %v301
      %v413 = vpop.f32.mrf.mxu0
      %v414 = vadd.f32 0.0, %v413
      %415 = vmatmul.f32.gmra.mxu0 %v304
      %v416 = vpop.f32.mrf.mxu0
      %v417 = vadd.f32 0.0, %v416
      %418 = vmatmul.f32.gmra.mxu0 %v307
      %v419 = vpop.f32.mrf.mxu0
      %v420 = vadd.f32 0.0, %v419
      %421 = vmatmul.f32.gmra.mxu0 %v310
      %v422 = vpop.f32.mrf.mxu0
      %v423 = vadd.f32 0.0, %v422
      %424 = vmatmul.f32.gmra.mxu0 %v313
      %v425 = vpop.f32.mrf.mxu0
      %v426 = vadd.f32 0.0, %v425
      %427 = vmatmul.f32.gmra.mxu0 %v316
      %v428 = vpop.f32.mrf.mxu0
      %v429 = vadd.f32 0.0, %v428
      %430 = vmatmul.f32.gmra.mxu0 %v319
      %v431 = vpop.f32.mrf.mxu0
      %v432 = vadd.f32 0.0, %v431
      %433 = vmatmul.f32.gmra.mxu0 %v322
      %v434 = vpop.f32.mrf.mxu0
      %v435 = vadd.f32 0.0, %v434
      %436 = vmatmul.f32.gmra.mxu0 %v325
      %v437 = vpop.f32.mrf.mxu0
      %v438 = vadd.f32 0.0, %v437
      %439 = vmatmul.f32.gmra.mxu0 %v328
      %v440 = vpop.f32.mrf.mxu0
      %v441 = vadd.f32 0.0, %v440
      %442 = vmatmul.f32.gmra.mxu0 %v331
      %v443 = vpop.f32.mrf.mxu0
      %v444 = vadd.f32 0.0, %v443
      %445 = vmatmul.f32.gmra.mxu0 %v334
      %v446 = vpop.f32.mrf.mxu0
      %v447 = vadd.f32 0.0, %v446
      %448 = vmatmul.f32.gmra.mxu0 %v337
      %v449 = vpop.f32.mrf.mxu0
      %v450 = vadd.f32 0.0, %v449
      %451 = vdwg.mxu0
      %v452 = vld [vmem:[%s2] sm:$0x1]
      %v454 = vperm.slane %v452, 0
      %v456 = vmul.f32 %v357, %v454
      %v457 = vmul.f32 %v360, %v454
      %v458 = vmul.f32 %v363, %v454
      %v459 = vmul.f32 %v366, %v454
      %v460 = vmul.f32 %v369, %v454
      %v461 = vmul.f32 %v372, %v454
      %v462 = vmul.f32 %v375, %v454
      %v463 = vmul.f32 %v378, %v454
      %v464 = vmul.f32 %v381, %v454
      %v465 = vmul.f32 %v384, %v454
      %v466 = vmul.f32 %v387, %v454
      %v467 = vmul.f32 %v390, %v454
      %v468 = vmul.f32 %v393, %v454
      %v469 = vmul.f32 %v396, %v454
      %v470 = vmul.f32 %v399, %v454
      %v471 = vmul.f32 %v402, %v454
      %v472 = vmul.f32 %v405, %v454
      %v473 = vmul.f32 %v408, %v454
      %v474 = vmul.f32 %v411, %v454
      %v475 = vmul.f32 %v414, %v454
      %v476 = vmul.f32 %v417, %v454
      %v477 = vmul.f32 %v420, %v454
      %v478 = vmul.f32 %v423, %v454
      %v479 = vmul.f32 %v426, %v454
      %v480 = vmul.f32 %v429, %v454
      %v481 = vmul.f32 %v432, %v454
      %v482 = vmul.f32 %v435, %v454
      %v483 = vmul.f32 %v438, %v454
      %v484 = vmul.f32 %v441, %v454
      %v485 = vmul.f32 %v444, %v454
      %v486 = vmul.f32 %v447, %v454
      %v487 = vmul.f32 %v450, %v454
      %v488 = vld [vmem:[%s3] sm:$0x1]
      %v490 = vperm.slane %v488, 0
      %v492 = vadd.f32 %v456, %v490
      %v493 = vadd.f32 %v457, %v490
      %v494 = vadd.f32 %v458, %v490
      %v495 = vadd.f32 %v459, %v490
      %v496 = vadd.f32 %v460, %v490
      %v497 = vadd.f32 %v461, %v490
      %v498 = vadd.f32 %v462, %v490
      %v499 = vadd.f32 %v463, %v490
      %v500 = vadd.f32 %v464, %v490
      %v501 = vadd.f32 %v465, %v490
      %v502 = vadd.f32 %v466, %v490
      %v503 = vadd.f32 %v467, %v490
      %v504 = vadd.f32 %v468, %v490
      %v505 = vadd.f32 %v469, %v490
      %v506 = vadd.f32 %v470, %v490
      %v507 = vadd.f32 %v471, %v490
      %v508 = vadd.f32 %v472, %v490
      %v509 = vadd.f32 %v473, %v490
      %v510 = vadd.f32 %v474, %v490
      %v511 = vadd.f32 %v475, %v490
      %v512 = vadd.f32 %v476, %v490
      %v513 = vadd.f32 %v477, %v490
      %v514 = vadd.f32 %v478, %v490
      %v515 = vadd.f32 %v479, %v490
      %v516 = vadd.f32 %v480, %v490
      %v517 = vadd.f32 %v481, %v490
      %v518 = vadd.f32 %v482, %v490
      %v519 = vadd.f32 %v483, %v490
      %v520 = vadd.f32 %v484, %v490
      %v521 = vadd.f32 %v485, %v490
      %v522 = vadd.f32 %v486, %v490
      %v523 = vadd.f32 %v487, %v490
      %v524 = vlaneseq
      %v525 = vand.u32 %v524, 127
      %vm526 = vcmp.lt.s32.totalorder %v525, 4
      %v527 = vmax.f32 %v492, 0.0
      %v528 = vmax.f32 %v493, 0.0
      %v529 = vmax.f32 %v494, 0.0
      %v530 = vmax.f32 %v495, 0.0
      %v531 = vmax.f32 %v496, 0.0
      %v532 = vmax.f32 %v497, 0.0
      %v533 = vmax.f32 %v498, 0.0
      %v534 = vmax.f32 %v499, 0.0
      %v535 = vmax.f32 %v500, 0.0
      %v536 = vmax.f32 %v501, 0.0
      %v537 = vmax.f32 %v502, 0.0
      %v538 = vmax.f32 %v503, 0.0
      %v539 = vmax.f32 %v504, 0.0
      %v540 = vmax.f32 %v505, 0.0
      %v541 = vmax.f32 %v506, 0.0
      %v542 = vmax.f32 %v507, 0.0
      %v543 = vmax.f32 %v508, 0.0
      %v544 = vmax.f32 %v509, 0.0
      %v545 = vmax.f32 %v510, 0.0
      %v546 = vmax.f32 %v511, 0.0
      %v547 = vmax.f32 %v512, 0.0
      %v548 = vmax.f32 %v513, 0.0
      %v549 = vmax.f32 %v514, 0.0
      %v550 = vmax.f32 %v515, 0.0
      %v551 = vmax.f32 %v516, 0.0
      %v552 = vmax.f32 %v517, 0.0
      %v553 = vmax.f32 %v518, 0.0
      %v554 = vmax.f32 %v519, 0.0
      %v555 = vmax.f32 %v520, 0.0
      %v556 = vmax.f32 %v521, 0.0
      %v557 = vmax.f32 %v522, 0.0
      %v558 = vmax.f32 %v523, 0.0
      %v559 = vsel %vm526, %v527, %v492
      %v560 = vsel %vm526, %v528, %v493
      %v561 = vsel %vm526, %v529, %v494
      %v562 = vsel %vm526, %v530, %v495
      %v563 = vsel %vm526, %v531, %v496
      %v564 = vsel %vm526, %v532, %v497
      %v565 = vsel %vm526, %v533, %v498
      %v566 = vsel %vm526, %v534, %v499
      %v567 = vsel %vm526, %v535, %v500
      %v568 = vsel %vm526, %v536, %v501
      %v569 = vsel %vm526, %v537, %v502
      %v570 = vsel %vm526, %v538, %v503
      %v571 = vsel %vm526, %v539, %v504
      %v572 = vsel %vm526, %v540, %v505
      %v573 = vsel %vm526, %v541, %v506
      %v574 = vsel %vm526, %v542, %v507
      %v575 = vsel %vm526, %v543, %v508
      %v576 = vsel %vm526, %v544, %v509
      %v577 = vsel %vm526, %v545, %v510
      %v578 = vsel %vm526, %v546, %v511
      %v579 = vsel %vm526, %v547, %v512
      %v580 = vsel %vm526, %v548, %v513
      %v581 = vsel %vm526, %v549, %v514
      %v582 = vsel %vm526, %v550, %v515
      %v583 = vsel %vm526, %v551, %v516
      %v584 = vsel %vm526, %v552, %v517
      %v585 = vsel %vm526, %v553, %v518
      %v586 = vsel %vm526, %v554, %v519
      %v587 = vsel %vm526, %v555, %v520
      %v588 = vsel %vm526, %v556, %v521
      %v589 = vsel %vm526, %v557, %v522
      %v590 = vsel %vm526, %v558, %v523
      %vm591 = vcmask 64512
      %592 = vst.msk [vmem:[%s199] sm:$0xff] %vm591, %v559
      %593 = vst.msk [vmem:[%s199 + $0x8] sm:$0xff] %vm591, %v560
      %594 = vst.msk [vmem:[%s199 + $0x10] sm:$0xff] %vm591, %v561
      %595 = vst.msk [vmem:[%s199 + $0x18] sm:$0xff] %vm591, %v562
      %596 = vst.msk [vmem:[%s199 + $0x20] sm:$0xff] %vm591, %v563
      %597 = vst.msk [vmem:[%s199 + $0x28] sm:$0xff] %vm591, %v564
      %598 = vst.msk [vmem:[%s199 + $0x30] sm:$0xff] %vm591, %v565
      %599 = vst.msk [vmem:[%s199 + $0x38] sm:$0xff] %vm591, %v566
      %600 = vst.msk [vmem:[%s199 + $0x40] sm:$0xff] %vm591, %v567
      %601 = vst.msk [vmem:[%s199 + $0x48] sm:$0xff] %vm591, %v568
      %602 = vst.msk [vmem:[%s199 + $0x50] sm:$0xff] %vm591, %v569
      %603 = vst.msk [vmem:[%s199 + $0x58] sm:$0xff] %vm591, %v570
      %604 = vst.msk [vmem:[%s199 + $0x60] sm:$0xff] %vm591, %v571
      %605 = vst.msk [vmem:[%s199 + $0x68] sm:$0xff] %vm591, %v572
      %606 = vst.msk [vmem:[%s199 + $0x70] sm:$0xff] %vm591, %v573
      %607 = vst.msk [vmem:[%s199 + $0x78] sm:$0xff] %vm591, %v574
      %608 = vst.msk [vmem:[%s199 + $0x80] sm:$0xff] %vm591, %v575
      %609 = vst.msk [vmem:[%s199 + $0x88] sm:$0xff] %vm591, %v576
      %610 = vst.msk [vmem:[%s199 + $0x90] sm:$0xff] %vm591, %v577
      %611 = vst.msk [vmem:[%s199 + $0x98] sm:$0xff] %vm591, %v578
      %612 = vst.msk [vmem:[%s199 + $0xa0] sm:$0xff] %vm591, %v579
      %613 = vst.msk [vmem:[%s199 + $0xa8] sm:$0xff] %vm591, %v580
      %614 = vst.msk [vmem:[%s199 + $0xb0] sm:$0xff] %vm591, %v581
      %615 = vst.msk [vmem:[%s199 + $0xb8] sm:$0xff] %vm591, %v582
      %616 = vst.msk [vmem:[%s199 + $0xc0] sm:$0xff] %vm591, %v583
      %617 = vst.msk [vmem:[%s199 + $0xc8] sm:$0xff] %vm591, %v584
      %618 = vst.msk [vmem:[%s199 + $0xd0] sm:$0xff] %vm591, %v585
      %619 = vst.msk [vmem:[%s199 + $0xd8] sm:$0xff] %vm591, %v586
      %620 = vst.msk [vmem:[%s199 + $0xe0] sm:$0xff] %vm591, %v587
      %621 = vst.msk [vmem:[%s199 + $0xe8] sm:$0xff] %vm591, %v588
      %622 = vst.msk [vmem:[%s199 + $0xf0] sm:$0xff] %vm591, %v589
      %623 = vst.msk [vmem:[%s199 + $0xf8] sm:$0xff] %vm591, %v590
      %s624 = smul.u32 32, %s15
      %p625 = scmp.lt.s32.totalorder %s624, 63
      %s626 = scalar_select %p625, %s624, 63
      %s627 = smul.addr %s626, 8
      %s628 = scalar_lea.vmem %s4, %s627
      // Predicated region
      $region37: #{tpu_custom_call.1} parent=35 // pred_check
        %p629 = pneg %p122
      $region38: #{tpu_custom_call.1} parent=35 // pred_check_branch
        %631 = sbr.rel (%p629) target = $region40
      $region39: #{tpu_custom_call.1} parent=35 // pred_region
        %s632 = smul.u32 32, %s15
      $region40: #{tpu_custom_call.1} parent=35 // pred_fallthru
        _
    $region36: #{tpu_custom_call.1} parent=5 // pred_fallthru
      _
    %p633 = scmp.le.s32.totalorder 2, %s10
    // Predicated region
    $region41: #{tpu_custom_call.1} parent=5 // pred_check
      %p634 = pneg %p633
    $region42: #{tpu_custom_call.1} parent=5 // pred_check_branch
      %636 = sbr.rel (%p634) target = $region44
    $region43: #{tpu_custom_call.1} parent=5 // pred_region
      %s637 = ssub.s32 %s10, 2
      // Predicated region
      $region45: #{tpu_custom_call.1} parent=43 // pred_check
        %p638 = pneg %p128
      $region46: #{tpu_custom_call.1} parent=43 // pred_check_branch
        %640 = sbr.rel (%p638) target = $region48
      $region47: #{tpu_custom_call.1} parent=43 // pred_region
        %s641 = smul.u32 32, %s16
        %p642 = scmp.lt.s32.totalorder %s641, 63
        %s643 = scalar_select %p642, %s641, 63
        %s644 = smul.addr %s643, 8
        %s645 = scalar_lea.vmem %s4, %s644
      $region48: #{tpu_custom_call.1} parent=43 // pred_fallthru
        _
    $region44: #{tpu_custom_call.1} parent=5 // pred_fallthru
      _
  $region6: #{tpu_custom_call.1} parent=0 // loop_footer
    %s14 = sadd.s32 1, %s10
  $region7: #{tpu_custom_call.1} parent=0 // loop_footer_branch
    %9 = sbr.rel target = $region3
  $region8: #{tpu_custom_call.1} parent=0 // loop_exit
    _

</llo_original>
